<compile_context>
chip_gen: v7x
topology: tpu7x:2x2x1
jax: 0.10.0
libtpu: 0.0.40
codegen_flags: <defaults>
</compile_context>

<pallas_src>
import functools

import jax
import jax.numpy as jnp
from jax import lax
from jax.experimental import pallas as pl
from jax.experimental.pallas import tpu as pltpu


H_FEAT = 16 * 4 * 3   # 192, first Linear out_features (as in the module)
N_OUT = 4             # second Linear out_features


def _round_up(a, m):
    return (a + m - 1) // m * m


def plan_k_tiling(d_in, *, tk_max=16384, n_splits=2):
    """K-axis tiling plan shared by offline weight prep and the forward pass.

    Returns (d_pad, tk, n_k) with d_pad == n_splits * n_k * tk and tk % 128 == 0.
    """
    assert tk_max % 128 == 0 and n_splits >= 1
    d_pad = _round_up(d_in, 128 * n_splits)
    per_split = d_pad // n_splits
    if per_split <= tk_max:
        tk = per_split
    else:
        tk = tk_max
        per_split = _round_up(per_split, tk)
        d_pad = per_split * n_splits
    return d_pad, tk, per_split // tk


def prepare_w1(w1, *, tk_max=16384, n_splits=2):
    """One-time OFFLINE prep of the first Linear weight (do at model load).

    torch layout (H, D_IN) f32  ->  (d_pad, H) bf16, K-major, zero-padded.
    Padded K rows are exactly zero, so they contribute nothing to the matmul.
    """
    _, d_in = w1.shape
    d_pad, _, _ = plan_k_tiling(d_in, tk_max=tk_max, n_splits=n_splits)
    w1_kt = jnp.asarray(w1, jnp.bfloat16).T            # (D_IN, H)
    if d_pad != d_in:
        w1_kt = jnp.pad(w1_kt, ((0, d_pad - d_in), (0, 0)))
    return w1_kt


def _w1_matmul_kernel(x_ref, w1_ref, part_ref):
    # grid = (n_splits, n_k); axis 1 is the K reduction *within* this split,
    # so the init guard is per-split-relative.
    @pl.when(pl.program_id(1) == 0)
    def _():
        part_ref[...] = jnp.zeros_like(part_ref)

    # (B, tk) bf16 x (tk, H) bf16 -> f32 accumulate directly into the resident
    # per-split output block (standard MXU (M,K)x(K,N), no transpose).
    part_ref[...] += jnp.dot(x_ref[...], w1_ref[...],
                             preferred_element_type=jnp.float32)


def _lif_epilogue_kernel(part_ref, w2_ref, out_ref, *, T, tau):
    h = jnp.sum(part_ref[...], axis=0)    # combine per-core partials -> (B, H)
    w2 = w2_ref[...]                      # (O, H) torch layout (tiny)
    inv_tau = jnp.float32(1.0 / tau)
    v_th = jnp.float32(1.0)

    def lif_step(_, carry):
        v1, v2, cnt = carry
        # LIF node 1 (decay_input=True, hard reset to 0)
        v1 = v1 + (h - v1) * inv_tau
        s1 = (v1 >= v_th).astype(jnp.float32)
        v1 = v1 * (1.0 - s1)
        # second Linear on spikes: contract H against torch-layout weight
        z = lax.dot_general(s1, w2,
                            dimension_numbers=(((1,), (1,)), ((), ())),
                            preferred_element_type=jnp.float32)
        # LIF node 2
        v2 = v2 + (z - v2) * inv_tau
        s2 = (v2 >= v_th).astype(jnp.float32)
        v2 = v2 * (1.0 - s2)
        return v1, v2, cnt + s2

    b, hd = h.shape
    o = out_ref.shape[-1]
    init = (jnp.zeros((b, hd), jnp.float32),   # v1
            jnp.zeros((b, o), jnp.float32),    # v2
            jnp.zeros((b, o), jnp.float32))    # spike counter
    _, _, cnt = lax.fori_loop(0, T, lif_step, init, unroll=min(T, 8))
    out_ref[...] = cnt * jnp.float32(1.0 / T)


def newnet1_forward(x, w1_kt, w2, *, T, tau, tk_max=16384, n_splits=2,
                    buffering=2):
    """x: (B, C, H, W); w1_kt: prepare_w1() output (d_pad, 192) bf16 (K-major);
    w2: (4, 192) torch layout."""
    B = x.shape[0]
    x2 = x.reshape(B, -1).astype(jnp.bfloat16)      # nn.Flatten (NCHW row-major)
    D_IN = x2.shape[1]
    d_pad, tk, n_k = plan_k_tiling(D_IN, tk_max=tk_max, n_splits=n_splits)

    K_w, H = w1_kt.shape
    if K_w != d_pad or w1_kt.dtype != jnp.bfloat16:
        raise ValueError(
            "w1_kt must come from prepare_w1() with matching tk_max/n_splits: "
            f"expected ({d_pad}, {H}) bf16, got {w1_kt.shape} {w1_kt.dtype}")
    O, H2 = w2.shape
    assert H2 == H
    w2 = jnp.asarray(w2, jnp.float32)

    # Only the small activation is padded at call time; W1 is pre-padded offline.
    if d_pad != D_IN:
        x2 = jnp.pad(x2, ((0, 0), (0, d_pad - D_IN)))

    # ---- kernel 1: K-tiled first matmul, split across TensorCores ----------
    tile_bytes = (H * tk + B * tk) * 2              # one W1 + one x tile (bf16)
    vmem_limit = int(min(48 << 20,
                         max(32 << 20,
                             buffering * tile_bytes + n_splits * B * H * 4
                             + O * H * 4 + (4 << 20))))

    # buffering > 2 (e.g. 3) can be swept once tiles are enlarged; default 2.
    extra = {} if buffering == 2 else {"pipeline_mode": pl.Buffered(buffering)}
    x_spec = pl.BlockSpec((B, tk), lambda c, k: (0, c * n_k + k), **extra)
    w1_spec = pl.BlockSpec((tk, H), lambda c, k: (c * n_k + k, 0), **extra)
    part_spec = pl.BlockSpec((pl.Squeezed(), B, H), lambda c, k: (c, 0, 0))

    mm_cost = pl.CostEstimate(
        flops=int(2 * B * d_pad * H),
        transcendentals=0,
        bytes_accessed=int(d_pad * H * 2 + B * d_pad * 2 + n_splits * B * H * 4))

    partials = pl.pallas_call(
        _w1_matmul_kernel,
        out_shape=jax.ShapeDtypeStruct((n_splits, B, H), jnp.float32),
        grid_spec=pltpu.PrefetchScalarGridSpec(
            num_scalar_prefetch=0,
            grid=(n_splits, n_k),
            in_specs=[x_spec, w1_spec],
            out_specs=part_spec),
        compiler_params=pltpu.CompilerParams(
            dimension_semantics=("parallel", "arbitrary"),
            vmem_limit_bytes=vmem_limit),
        cost_estimate=mm_cost,
    )(x2, w1_kt)

    # ---- kernel 2: tiny combine + T LIF timesteps + second Linear ----------
    lif_cost = pl.CostEstimate(
        flops=int(T * (2 * B * H * O + 8 * B * (H + O))),
        transcendentals=0,
        bytes_accessed=int(n_splits * B * H * 4 + O * H * 4 + B * O * 4))

    return pl.pallas_call(
        functools.partial(_lif_epilogue_kernel, T=T, tau=tau),
        out_shape=jax.ShapeDtypeStruct((B, O), jnp.float32),
        grid=(1,),
        in_specs=[pl.BlockSpec((n_splits, B, H), lambda i: (0, 0, 0)),
                  pl.BlockSpec((O, H), lambda i: (0, 0))],
        out_specs=pl.BlockSpec((B, O), lambda i: (0, 0)),
        cost_estimate=lif_cost,
    )(partials, w2)


if __name__ == "__main__":
    T, tau = 4, 2.0
    B, C, Hs, Ws = 2, 4, 16, 16          # small stand-in for the real (16, 181, 156)
    D_IN = C * Hs * Ws                   # 1024

    key = jax.random.PRNGKey(0)
    kx, k1, k2 = jax.random.split(key, 3)
    x = jax.random.normal(kx, (B, C, Hs, Ws), jnp.float32)
    # torch Linear weight layout: (out_features, in_features)
    w1 = jax.random.uniform(k1, (H_FEAT, D_IN), jnp.float32, -1.0, 1.0) \
        / jnp.sqrt(jnp.float32(D_IN))
    w2 = jax.random.uniform(k2, (N_OUT, H_FEAT), jnp.float32, -1.0, 1.0) \
        / jnp.sqrt(jnp.float32(H_FEAT))

    # One-time OFFLINE weight prep (bf16 cast + zero-pad + K-major transpose).
    w1_kt = prepare_w1(w1, tk_max=16384, n_splits=2)

    out = newnet1_forward(x, w1_kt, w2, T=T, tau=tau, tk_max=16384, n_splits=2)
    out = jax.block_until_ready(out)
    assert out.shape == (B, N_OUT)
    # Outputs are average spike rates over T steps -> finite and in [0, 1].
    assert bool(jnp.all(jnp.isfinite(out)))
    assert bool(jnp.all((out >= 0.0) & (out <= 1.0)))
    print("KERNEL_OK")
</pallas_src>

<mosaic_0001>
module attributes {stable_mosaic.version = 11 : i64} {
  func.func @_w1_matmul_kernel(%arg0: i32, %arg1: i32, %arg2: memref<2x512xbf16, #tpu.memory_space<vmem>>, %arg3: memref<512x192xbf16, #tpu.memory_space<vmem>>, %arg4: memref<1x2x192xf32, #tpu.memory_space<vmem>>) attributes {dimension_semantics = [#tpu.dimension_semantics<parallel>, #tpu.dimension_semantics<arbitrary>], iteration_bounds = array<i64: 2, 1>, scalar_prefetch = 0 : i64, scratch_operands = 0 : i64, tpu.core_type = #tpu.core_type<tc>, window_params = [{transform_indices = @transform_0, window_bounds = array<i64: 2, 512>}, {transform_indices = @transform_1, window_bounds = array<i64: 512, 192>}, {transform_indices = @transform_2, window_bounds = array<i64: 1, 2, 192>}]} {
    %c0_i32 = arith.constant 0 : i32
    %0 = arith.cmpi eq, %arg1, %c0_i32 : i32
    %1 = arith.extui %0 : i1 to i32
    %c0_i32_0 = arith.constant 0 : i32
    %2 = arith.cmpi ne, %1, %c0_i32_0 : i32
    scf.if %2 {
      %cst_10 = arith.constant 0.000000e+00 : f32
      %12 = vector.broadcast %cst_10 : f32 to vector<2x192xf32>
      %c0_11 = arith.constant 0 : index
      %c0_12 = arith.constant 0 : index
      %c0_13 = arith.constant 0 : index
      %13 = vector.load %arg4[%c0_11, %c0_12, %c0_13] : memref<1x2x192xf32, #tpu.memory_space<vmem>>, vector<1x2x192xf32>
      %14 = vector.shape_cast %13 : vector<1x2x192xf32> to vector<2x192xf32>
      %15 = vector.shape_cast %12 : vector<2x192xf32> to vector<1x2x192xf32>
      tpu.vector_store %arg4[%c0_11, %c0_12, %c0_13], %15 {strides = array<i32>} : memref<1x2x192xf32, #tpu.memory_space<vmem>>, vector<1x2x192xf32>,
    } else {
    }
    %c0 = arith.constant 0 : index
    %c0_1 = arith.constant 0 : index
    %c0_2 = arith.constant 0 : index
    %3 = vector.load %arg4[%c0, %c0_1, %c0_2] : memref<1x2x192xf32, #tpu.memory_space<vmem>>, vector<1x2x192xf32>
    %4 = vector.shape_cast %3 : vector<1x2x192xf32> to vector<2x192xf32>
    %c0_3 = arith.constant 0 : index
    %c0_4 = arith.constant 0 : index
    %5 = vector.load %arg2[%c0_3, %c0_4] : memref<2x512xbf16, #tpu.memory_space<vmem>>, vector<2x512xbf16>
    %c0_5 = arith.constant 0 : index
    %c0_6 = arith.constant 0 : index
    %6 = vector.load %arg3[%c0_5, %c0_6] : memref<512x192xbf16, #tpu.memory_space<vmem>>, vector<512x192xbf16>
    %cst = arith.constant dense<0.000000e+00> : vector<2x192xf32>
    %7 = tpu.matmul %5, %6, %cst {dimension_numbers = #tpu.dot_dimension_numbers<[1], [0], [0], [1], [0, 0, 1, 1], [], []>} : vector<2x512xbf16>, vector<512x192xbf16>, vector<2x192xf32> -> vector<2x192xf32>
    %8 = arith.addf %4, %7 : vector<2x192xf32>
    %c0_7 = arith.constant 0 : index
    %c0_8 = arith.constant 0 : index
    %c0_9 = arith.constant 0 : index
    %9 = vector.load %arg4[%c0_7, %c0_8, %c0_9] : memref<1x2x192xf32, #tpu.memory_space<vmem>>, vector<1x2x192xf32>
    %10 = vector.shape_cast %9 : vector<1x2x192xf32> to vector<2x192xf32>
    %11 = vector.shape_cast %8 : vector<2x192xf32> to vector<1x2x192xf32>
    tpu.vector_store %arg4[%c0_7, %c0_8, %c0_9], %11 {strides = array<i32>} : memref<1x2x192xf32, #tpu.memory_space<vmem>>, vector<1x2x192xf32>,
    return
  }
  func.func @transform_0(%arg0: i32, %arg1: i32) -> (i32, i32) {
    %c1_i32 = arith.constant 1 : i32
    %0 = arith.muli %arg0, %c1_i32 : i32
    %1 = arith.addi %0, %arg1 : i32
    %c0_i32 = arith.constant 0 : i32
    %c0_i32_0 = arith.constant 0 : i32
    return %c0_i32, %1 : i32, i32
  }
  func.func @transform_1(%arg0: i32, %arg1: i32) -> (i32, i32) {
    %c1_i32 = arith.constant 1 : i32
    %0 = arith.muli %arg0, %c1_i32 : i32
    %1 = arith.addi %0, %arg1 : i32
    %c0_i32 = arith.constant 0 : i32
    %c0_i32_0 = arith.constant 0 : i32
    return %1, %c0_i32 : i32, i32
  }
  func.func @transform_2(%arg0: i32, %arg1: i32) -> (i32, i32, i32) {
    %c0_i32 = arith.constant 0 : i32
    %c0_i32_0 = arith.constant 0 : i32
    %c0_i32_1 = arith.constant 0 : i32
    return %arg0, %c0_i32, %c0_i32_0 : i32, i32, i32
  }
}

</mosaic_0001>

<llo_original>
// kernel: tpu_custom_call.1
$region0: #{tpu_custom_call.1}
  #allocation0 [shape = 'u32[]', space=smem, size = 0x4, offset = 0x4, fixed_abs, tag = 'smem constant byte address 0x4 - core index']
  #allocation1 [shape = 'u32[144,128]{1,0:T(1,128)}', space=vmem, size = 0x12000, scoped, tag = 'internal scratch']
  %s0 = inlined_call_operand.vmem [shape: bf16[2,1024], index: 0, kind: input, shape index: {}]
  %s1 = inlined_call_operand.vmem [shape: bf16[1024,192], index: 1, kind: input, shape index: {}]
  %s2 = inlined_call_operand.hbm [shape: f32[2,2,192], index: 2, kind: output, shape index: {}]
  %s3 = sld [smem:[#allocation0]]
  $region45: #{tpu_custom_call.1} parent=0
    _
  %s5 = ssub.s32 1, %s3
  %s6 = scalar_select 0, %s5, %s3
  $region1: #{tpu_custom_call.1} parent=0
    #allocation2 [shape = 'u8[4096]{0}', space=vmem, size = 0x1000, scoped, tag = 'output window, operand 0']
    #allocation3 [shape = 's32[2]{0}', space=sflag, size = 0x8, scoped, tag = 'scoped memory for tpu_custom_call.1']
    %7 = vsyncpa [#allocation3], 0
    %s8 = scalar_lea.sflag [#allocation3], 1
    %9 = vsyncpa %s8, 0
    loop: start=0, step=1, limit=4
    $region2: #{tpu_custom_call.1} parent=1 // loop_pre_header
      _
    $region3: #{tpu_custom_call.1} parent=1 // loop_header
      %s11 = sphi 0, %s15
      %p12 = scmp.ge.s32.totalorder %s11, 4
      %s18 = sphi 0, %s30
      %s19 = sphi 0, %s26
      %s20 = sphi 0, %s18
      %s21 = sphi 0, %s19
      %s22 = sphi 0, %s20
      %s23 = sphi 0, %s21
      %s35 = sphi 0, %s37
      %s38 = sphi 0, %s35
      %s39 = sphi 0, %s38
      %s55 = sphi 0, %s39
      %s63 = sphi 0, %s65
      %s66 = sphi 0, %s63
      %s67 = sphi 0, %s66
      %s83 = sphi 0, %s67
      %s89 = sphi 0, %s91
      %s92 = sphi 0, %s89
      %s93 = sphi 0, %s92
      %s109 = sphi 0, %s93
    $region4: #{tpu_custom_call.1} parent=1 // loop_header_branch
      %14 = sbr.rel (%p12) target = $region8
    $region5: #{tpu_custom_call.1} parent=1 // loop_body
      %s16 = ssub.s32 %s11, 1
      %s17 = ssub.s32 %s11, 2
      %s24 = sadd.s32 1, %s19
      %p25 = scmp.ge.s32.totalorder %s24, 1
      %s26 = scalar_select %p25, 0, %s24
      %s27 = sadd.s32 1, %s18
      %s28 = scalar_select %p25, %s27, %s18
      %p29 = scmp.ge.s32.totalorder %s28, 2
      %s30 = scalar_select %p29, 0, %s28
      %s31 = sadd.s32 %s18, %s19
      %s32 = sadd.s32 %s30, %s26
      %s33 = ssub.s32 %s31, %s32
      %p34 = scmp.eq.s32.totalorder %s33, 0
      %s36 = sadd.s32 %s35, 1
      %s37 = scalar_select %p34, %s35, %s36
      %p40 = pneg %p34
      %p41 = scmp.eq.s32.totalorder %s11, 1
      %p42 = por %p40, %p41
      %p43 = scmp.ne.s32.totalorder %s35, %s38
      %p44 = scmp.eq.s32.totalorder %s11, 0
      %p45 = por %p43, %p44
      %p46 = scmp.ne.s32.totalorder %s35, %s38
      %p47 = scmp.eq.s32.totalorder %s16, 1
      %p48 = por %p46, %p47
      %p49 = scmp.ne.s32.totalorder %s38, %s39
      %p50 = scmp.eq.s32.totalorder %s16, 0
      %p51 = por %p49, %p50
      %p52 = scmp.ne.s32.totalorder %s38, %s39
      %p53 = scmp.eq.s32.totalorder %s17, 1
      %p54 = por %p52, %p53
      %p56 = scmp.ne.s32.totalorder %s39, %s55
      %p57 = scmp.eq.s32.totalorder %s17, 0
      %p58 = por %p56, %p57
      %s59 = sadd.s32 %s18, %s19
      %s60 = sadd.s32 %s30, %s26
      %s61 = ssub.s32 %s59, %s60
      %p62 = scmp.eq.s32.totalorder %s61, 0
      %s64 = sadd.s32 %s63, 1
      %s65 = scalar_select %p62, %s63, %s64
      %p68 = pneg %p62
      %p69 = scmp.eq.s32.totalorder %s11, 1
      %p70 = por %p68, %p69
      %p71 = scmp.ne.s32.totalorder %s63, %s66
      %p72 = scmp.eq.s32.totalorder %s11, 0
      %p73 = por %p71, %p72
      %p74 = scmp.ne.s32.totalorder %s63, %s66
      %p75 = scmp.eq.s32.totalorder %s16, 1
      %p76 = por %p74, %p75
      %p77 = scmp.ne.s32.totalorder %s66, %s67
      %p78 = scmp.eq.s32.totalorder %s16, 0
      %p79 = por %p77, %p78
      %p80 = scmp.ne.s32.totalorder %s66, %s67
      %p81 = scmp.eq.s32.totalorder %s17, 1
      %p82 = por %p80, %p81
      %p84 = scmp.ne.s32.totalorder %s67, %s83
      %p85 = scmp.eq.s32.totalorder %s17, 0
      %p86 = por %p84, %p85
      %s87 = ssub.s32 %s18, %s30
      %p88 = scmp.eq.s32.totalorder %s87, 0
      %s90 = sadd.s32 %s89, 1
      %s91 = scalar_select %p88, %s89, %s90
      %p94 = pneg %p88
      %p95 = scmp.eq.s32.totalorder %s11, 1
      %p96 = por %p94, %p95
      %p97 = scmp.ne.s32.totalorder %s89, %s92
      %p98 = scmp.eq.s32.totalorder %s11, 0
      %p99 = por %p97, %p98
      %p100 = scmp.ne.s32.totalorder %s89, %s92
      %p101 = scmp.eq.s32.totalorder %s16, 1
      %p102 = por %p100, %p101
      %p103 = scmp.ne.s32.totalorder %s92, %s93
      %p104 = scmp.eq.s32.totalorder %s16, 0
      %p105 = por %p103, %p104
      %p106 = scmp.ne.s32.totalorder %s92, %s93
      %p107 = scmp.eq.s32.totalorder %s17, 1
      %p108 = por %p106, %p107
      %p110 = scmp.ne.s32.totalorder %s93, %s109
      %p111 = scmp.eq.s32.totalorder %s17, 0
      %p112 = por %p110, %p111
      %p113 = scmp.le.s32.totalorder 1, %s11
      %p114 = scmp.lt.s32.totalorder %s11, 3
      %p115 = pnand %p113, %p114
      %p116 = pneg %p115
      // Predicated region
      $region9: #{tpu_custom_call.1} parent=5 // pred_check
        _
      $region10: #{tpu_custom_call.1} parent=5 // pred_check_branch
        %118 = sbr.rel (%p115) target = $region12
      $region11: #{tpu_custom_call.1} parent=5 // pred_region
        %s119 = ssub.s32 %s11, 1
      $region12: #{tpu_custom_call.1} parent=5 // pred_fallthru
        _
      %p120 = scmp.lt.s32.totalorder %s11, 2
      // Predicated region
      $region13: #{tpu_custom_call.1} parent=5 // pred_check
        %p121 = pneg %p120
      $region14: #{tpu_custom_call.1} parent=5 // pred_check_branch
        %123 = sbr.rel (%p121) target = $region16
      $region15: #{tpu_custom_call.1} parent=5 // pred_region
        // Predicated region
        $region17: #{tpu_custom_call.1} parent=15 // pred_check
          %p124 = pneg %p45
        $region18: #{tpu_custom_call.1} parent=15 // pred_check_branch
          %126 = sbr.rel (%p124) target = $region20
        $region19: #{tpu_custom_call.1} parent=15 // pred_region
          %s127 = sadd.s32 %s18, %s19
          %s128 = smul.u32 4, %s127
          %p129 = scmp.lt.s32.totalorder %s128, 7
          %s130 = scalar_select %p129, %s128, 7
          %s131 = scalar_lea.vmem %s0, %s130
          %s132 = sadd.s32 %s18, %s19
          %s133 = smul.u32 4, %s132
        $region20: #{tpu_custom_call.1} parent=15 // pred_fallthru
          _
        // Predicated region
        $region21: #{tpu_custom_call.1} parent=15 // pred_check
          %p134 = pneg %p73
        $region22: #{tpu_custom_call.1} parent=15 // pred_check_branch
          %136 = sbr.rel (%p134) target = $region24
        $region23: #{tpu_custom_call.1} parent=15 // pred_region
          %s137 = sadd.s32 %s18, %s19
          %s138 = smul.u32 64, %s137
          %p139 = scmp.lt.s32.totalorder %s138, 127
          %s140 = scalar_select %p139, %s138, 127
          %s141 = smul.addr %s140, 2
          %s142 = smul.addr %s141, 4
          %s143 = scalar_lea.vmem %s1, %s142
          %s144 = sadd.s32 %s18, %s19
          %s145 = smul.u32 64, %s144
        $region24: #{tpu_custom_call.1} parent=15 // pred_fallthru
          _
      $region16: #{tpu_custom_call.1} parent=5 // pred_fallthru
        _
      %p146 = scmp.le.s32.totalorder 1, %s11
      %p147 = scmp.lt.s32.totalorder %s11, 3
      %p148 = pnand %p146, %p147
      %p149 = pneg %p148
      // Predicated region
      $region25: #{tpu_custom_call.1} parent=5 // pred_check
        _
      $region26: #{tpu_custom_call.1} parent=5 // pred_check_branch
        %151 = sbr.rel (%p148) target = $region28
      $region27: #{tpu_custom_call.1} parent=5 // pred_region
        %s152 = ssub.s32 %s11, 1
        %s153 = sadd.s32 %s20, %s21
        %s154 = smul.u32 4, %s153
        %p155 = scmp.lt.s32.totalorder %s154, 7
        %s156 = scalar_select %p155, %s154, 7
        %s157 = scalar_lea.vmem %s0, %s156
        %p158 = pneg %p51
        %p159 = pneg %p48
        %s160 = sadd.s32 %s20, %s21
        %s161 = smul.u32 64, %s160
        %p162 = scmp.lt.s32.totalorder %s161, 127
        %s163 = scalar_select %p162, %s161, 127
        %s164 = smul.addr %s163, 2
        %s165 = smul.addr %s164, 4
        %s166 = scalar_lea.vmem %s1, %s165
        %p167 = pneg %p79
        %p168 = pneg %p76
        %p169 = pneg %p105
        %p170 = pneg %p102
        %s171 = sand.u32 %s92, 1
        %s172 = scalar_lea.sflag [#allocation3], %s171
        %s173 = sand.u32 %s92, 1
        %s174 = smul.addr %s173, 4
        %s175 = scalar_lea.vmem [#allocation2], %s174
        %s176 = sadd.s32 %s20, %s21
        %s177 = smul.u32 4, %s176
        %p178 = scmp.lt.s32.totalorder %s177, 7
        %s179 = scalar_select %p178, %s177, 7
        %s180 = scalar_lea.vmem %s0, %s179
        %s181 = sadd.s32 %s20, %s21
        %s182 = smul.u32 4, %s181
        %s183 = sadd.s32 %s20, %s21
        %s184 = smul.u32 64, %s183
        %p185 = scmp.lt.s32.totalorder %s184, 127
        %s186 = scalar_select %p185, %s184, 127
        %s187 = smul.addr %s186, 2
        %s188 = smul.addr %s187, 4
        %s189 = scalar_lea.vmem %s1, %s188
        %s190 = sadd.s32 %s20, %s21
        %s191 = smul.u32 64, %s190
        %p192 = scmp.eq.s32.totalorder %s21, 0
        // Predicated region
        $region29: #{tpu_custom_call.1} parent=27 // pred_check
          %p193 = pneg %p192
        $region30: #{tpu_custom_call.1} parent=27 // pred_check_branch
          %195 = sbr.rel (%p193) target = $region32
        $region31: #{tpu_custom_call.1} parent=27 // pred_region
          %vm196 = vcmask 1041408
          %vm197 = vcmask 519170
          %vm198 = vmor %vm197, %vm196
          %199 = vst.msk [vmem:[%s175] sm:$0xf] %vm198, 0.0
        $region32: #{tpu_custom_call.1} parent=27 // pred_fallthru
          _
        %v200 = vld [vmem:[%s175] sm:$0xf]
        %v201 = vld [vmem:[%s180] sm:$0xf]
        %v202 = vld [vmem:[%s189] sm:$0xff]
        %v203 = vld [vmem:[%s189 + $0x8] sm:$0xff]
        %v204 = vld [vmem:[%s189 + $0x10] sm:$0xff]
        %v205 = vld [vmem:[%s189 + $0x18] sm:$0xff]
        %v206 = vld [vmem:[%s189 + $0x20] sm:$0xff]
        %v207 = vld [vmem:[%s189 + $0x28] sm:$0xff]
        %v208 = vld [vmem:[%s189 + $0x30] sm:$0xff]
        %v209 = vld [vmem:[%s189 + $0x38] sm:$0xff]
        %v210 = vld [vmem:[%s189 + $0x40] sm:$0xff]
        %v211 = vld [vmem:[%s189 + $0x48] sm:$0xff]
        %v212 = vld [vmem:[%s189 + $0x50] sm:$0xff]
        %v213 = vld [vmem:[%s189 + $0x58] sm:$0xff]
        %v214 = vld [vmem:[%s189 + $0x60] sm:$0xff]
        %v215 = vld [vmem:[%s189 + $0x68] sm:$0xff]
        %v216 = vld [vmem:[%s189 + $0x70] sm:$0xff]
        %v217 = vld [vmem:[%s189 + $0x78] sm:$0xff]
        %v218 = vld [vmem:[%s189 + $0x80] sm:$0xff]
        %v219 = vld [vmem:[%s189 + $0x88] sm:$0xff]
        %v220 = vld [vmem:[%s189 + $0x90] sm:$0xff]
        %v221 = vld [vmem:[%s189 + $0x98] sm:$0xff]
        %v222 = vld [vmem:[%s189 + $0xa0] sm:$0xff]
        %v223 = vld [vmem:[%s189 + $0xa8] sm:$0xff]
        %v224 = vld [vmem:[%s189 + $0xb0] sm:$0xff]
        %v225 = vld [vmem:[%s189 + $0xb8] sm:$0xff]
        %v226 = vld [vmem:[%s189 + $0xc0] sm:$0xff]
        %v227 = vld [vmem:[%s189 + $0xc8] sm:$0xff]
        %v228 = vld [vmem:[%s189 + $0xd0] sm:$0xff]
        %v229 = vld [vmem:[%s189 + $0xd8] sm:$0xff]
        %v230 = vld [vmem:[%s189 + $0xe0] sm:$0xff]
        %v231 = vld [vmem:[%s189 + $0xe8] sm:$0xff]
        %v232 = vld [vmem:[%s189 + $0xf0] sm:$0xff]
        %v233 = vld [vmem:[%s189 + $0xf8] sm:$0xff]
        %v234 = vld [vmem:[%s189 + $0x100] sm:$0xff]
        %v235 = vld [vmem:[%s189 + $0x108] sm:$0xff]
        %v236 = vld [vmem:[%s189 + $0x110] sm:$0xff]
        %v237 = vld [vmem:[%s189 + $0x118] sm:$0xff]
        %v238 = vld [vmem:[%s189 + $0x120] sm:$0xff]
        %v239 = vld [vmem:[%s189 + $0x128] sm:$0xff]
        %v240 = vld [vmem:[%s189 + $0x130] sm:$0xff]
        %v241 = vld [vmem:[%s189 + $0x138] sm:$0xff]
        %v242 = vld [vmem:[%s189 + $0x140] sm:$0xff]
        %v243 = vld [vmem:[%s189 + $0x148] sm:$0xff]
        %v244 = vld [vmem:[%s189 + $0x150] sm:$0xff]
        %v245 = vld [vmem:[%s189 + $0x158] sm:$0xff]
        %v246 = vld [vmem:[%s189 + $0x160] sm:$0xff]
        %v247 = vld [vmem:[%s189 + $0x168] sm:$0xff]
        %v248 = vld [vmem:[%s189 + $0x170] sm:$0xff]
        %v249 = vld [vmem:[%s189 + $0x178] sm:$0xff]
        %v250 = vld [vmem:[%s189 + $0x180] sm:$0xff]
        %v251 = vld [vmem:[%s189 + $0x188] sm:$0xff]
        %v252 = vld [vmem:[%s189 + $0x190] sm:$0xff]
        %v253 = vld [vmem:[%s189 + $0x198] sm:$0xff]
        %v254 = vld [vmem:[%s189 + $0x1a0] sm:$0xff]
        %v255 = vld [vmem:[%s189 + $0x1a8] sm:$0xff]
        %v256 = vld [vmem:[%s189 + $0x1b0] sm:$0xff]
        %v257 = vld [vmem:[%s189 + $0x1b8] sm:$0xff]
        %v258 = vld [vmem:[%s189 + $0x1c0] sm:$0xff]
        %v259 = vld [vmem:[%s189 + $0x1c8] sm:$0xff]
        %v260 = vld [vmem:[%s189 + $0x1d0] sm:$0xff]
        %v261 = vld [vmem:[%s189 + $0x1d8] sm:$0xff]
        %v262 = vld [vmem:[%s189 + $0x1e0] sm:$0xff]
        %v263 = vld [vmem:[%s189 + $0x1e8] sm:$0xff]
        %v264 = vld [vmem:[%s189 + $0x1f0] sm:$0xff]
        %v265 = vld [vmem:[%s189 + $0x1f8] sm:$0xff]
        %v268 = vunpack.c.l.s4 1966171168
        %v269 = vunpack.c.0.s8 %v268
        %v270 = vlaneseq
        %v271 = vshrl.u32 %v270, 7
        %v272 = vsub.s32 %v269, %v271
        %v273 = vrot.slane %v201, %v272
        %v274 = vcombine.high %v273, %v273
        %v276 = vunpack.c.l.s4 1966171168
        %v277 = vunpack.c.0.s8 %v276
        %v278 = vlaneseq
        %v279 = vshrl.u32 %v278, 7
        %v280 = vsub.s32 %v277, %v279
        %v281 = vrot.slane %v273, %v280
        %v283 = vunpack.c.l.s4 1966171168
        %v284 = vunpack.c.0.s8 %v283
        %v285 = vlaneseq
        %v286 = vshrl.u32 %v285, 7
        %v287 = vsub.s32 %v284, %v286
        %v288 = vrot.slane %v274, %v287
        %v289 = vcombine.high %v281, %v281
        %v290 = vcombine.high %v288, %v288
        %v359 = vunpack.c.l.b16 %v202
        %v360 = vunpack.c.h.b16 %v202
        %v361 = vunpack.c.l.b16 %v203
        %v362 = vunpack.c.h.b16 %v203
        %v363 = vunpack.c.l.b16 %v204
        %v364 = vunpack.c.h.b16 %v204
        %v365 = vunpack.c.l.b16 %v205
        %v366 = vunpack.c.h.b16 %v205
        %v367 = vunpack.c.l.b16 %v206
        %v368 = vunpack.c.h.b16 %v206
        %v369 = vunpack.c.l.b16 %v207
        %v370 = vunpack.c.h.b16 %v207
        %v371 = vunpack.c.l.b16 %v208
        %v372 = vunpack.c.h.b16 %v208
        %v373 = vunpack.c.l.b16 %v209
        %v374 = vunpack.c.h.b16 %v209
        %v375 = vunpack.c.l.b16 %v210
        %v376 = vunpack.c.h.b16 %v210
        %v377 = vunpack.c.l.b16 %v211
        %v378 = vunpack.c.h.b16 %v211
        %v379 = vunpack.c.l.b16 %v212
        %v380 = vunpack.c.h.b16 %v212
        %v381 = vunpack.c.l.b16 %v213
        %v382 = vunpack.c.h.b16 %v213
        %v383 = vunpack.c.l.b16 %v214
        %v384 = vunpack.c.h.b16 %v214
        %v385 = vunpack.c.l.b16 %v215
        %v386 = vunpack.c.h.b16 %v215
        %v387 = vunpack.c.l.b16 %v216
        %v388 = vunpack.c.h.b16 %v216
        %v389 = vunpack.c.l.b16 %v217
        %v390 = vunpack.c.h.b16 %v217
        %v391 = vunpack.c.l.b16 %v218
        %v392 = vunpack.c.h.b16 %v218
        %v393 = vunpack.c.l.b16 %v219
        %v394 = vunpack.c.h.b16 %v219
        %v395 = vunpack.c.l.b16 %v220
        %v396 = vunpack.c.h.b16 %v220
        %v397 = vunpack.c.l.b16 %v221
        %v398 = vunpack.c.h.b16 %v221
        %v399 = vunpack.c.l.b16 %v222
        %v400 = vunpack.c.h.b16 %v222
        %v401 = vunpack.c.l.b16 %v223
        %v402 = vunpack.c.h.b16 %v223
        %v403 = vunpack.c.l.b16 %v224
        %v404 = vunpack.c.h.b16 %v224
        %v405 = vunpack.c.l.b16 %v225
        %v406 = vunpack.c.h.b16 %v225
        %v407 = vunpack.c.l.b16 %v226
        %v408 = vunpack.c.h.b16 %v226
        %v409 = vunpack.c.l.b16 %v227
        %v410 = vunpack.c.h.b16 %v227
        %v411 = vunpack.c.l.b16 %v228
        %v412 = vunpack.c.h.b16 %v228
        %v413 = vunpack.c.l.b16 %v229
        %v414 = vunpack.c.h.b16 %v229
        %v415 = vunpack.c.l.b16 %v230
        %v416 = vunpack.c.h.b16 %v230
        %v417 = vunpack.c.l.b16 %v231
        %v418 = vunpack.c.h.b16 %v231
        %v419 = vunpack.c.l.b16 %v232
        %v420 = vunpack.c.h.b16 %v232
        %v421 = vunpack.c.l.b16 %v233
        %v422 = vunpack.c.h.b16 %v233
        %v423 = vunpack.c.l.b16 %v234
        %v424 = vunpack.c.h.b16 %v234
        %v425 = vunpack.c.l.b16 %v235
        %v426 = vunpack.c.h.b16 %v235
        %v427 = vunpack.c.l.b16 %v236
        %v428 = vunpack.c.h.b16 %v236
        %v429 = vunpack.c.l.b16 %v237
        %v430 = vunpack.c.h.b16 %v237
        %v431 = vunpack.c.l.b16 %v238
        %v432 = vunpack.c.h.b16 %v238
        %v433 = vunpack.c.l.b16 %v239
        %v434 = vunpack.c.h.b16 %v239
        %v435 = vunpack.c.l.b16 %v240
        %v436 = vunpack.c.h.b16 %v240
        %v437 = vunpack.c.l.b16 %v241
        %v438 = vunpack.c.h.b16 %v241
        %v439 = vunpack.c.l.b16 %v242
        %v440 = vunpack.c.h.b16 %v242
        %v441 = vunpack.c.l.b16 %v243
        %v442 = vunpack.c.h.b16 %v243
        %v443 = vunpack.c.l.b16 %v244
        %v444 = vunpack.c.h.b16 %v244
        %v445 = vunpack.c.l.b16 %v245
        %v446 = vunpack.c.h.b16 %v245
        %v447 = vunpack.c.l.b16 %v246
        %v448 = vunpack.c.h.b16 %v246
        %v449 = vunpack.c.l.b16 %v247
        %v450 = vunpack.c.h.b16 %v247
        %v451 = vunpack.c.l.b16 %v248
        %v452 = vunpack.c.h.b16 %v248
        %v453 = vunpack.c.l.b16 %v249
        %v454 = vunpack.c.h.b16 %v249
        %v455 = vunpack.c.l.b16 %v250
        %v456 = vunpack.c.h.b16 %v250
        %v457 = vunpack.c.l.b16 %v251
        %v458 = vunpack.c.h.b16 %v251
        %v459 = vunpack.c.l.b16 %v252
        %v460 = vunpack.c.h.b16 %v252
        %v461 = vunpack.c.l.b16 %v253
        %v462 = vunpack.c.h.b16 %v253
        %v463 = vunpack.c.l.b16 %v254
        %v464 = vunpack.c.h.b16 %v254
        %v465 = vunpack.c.l.b16 %v255
        %v466 = vunpack.c.h.b16 %v255
        %v467 = vunpack.c.l.b16 %v256
        %v468 = vunpack.c.h.b16 %v256
        %v469 = vunpack.c.l.b16 %v257
        %v470 = vunpack.c.h.b16 %v257
        %v471 = vunpack.c.l.b16 %v258
        %v472 = vunpack.c.h.b16 %v258
        %v473 = vunpack.c.l.b16 %v259
        %v474 = vunpack.c.h.b16 %v259
        %v475 = vunpack.c.l.b16 %v260
        %v476 = vunpack.c.h.b16 %v260
        %v477 = vunpack.c.l.b16 %v261
        %v478 = vunpack.c.h.b16 %v261
        %v479 = vunpack.c.l.b16 %v262
        %v480 = vunpack.c.h.b16 %v262
        %v481 = vunpack.c.l.b16 %v263
        %v482 = vunpack.c.h.b16 %v263
        %v483 = vunpack.c.l.b16 %v264
        %v484 = vunpack.c.h.b16 %v264
        %v485 = vunpack.c.l.b16 %v265
        %v486 = vunpack.c.h.b16 %v265
        %v487 = vpack.c.b16 %v361, %v359
        %v488 = vpack.c.b16 %v362, %v360
        %v489 = vpack.c.b16 %v365, %v363
        %v490 = vpack.c.b16 %v366, %v364
        %v491 = vpack.c.b16 %v369, %v367
        %v492 = vpack.c.b16 %v370, %v368
        %v493 = vpack.c.b16 %v373, %v371
        %v494 = vpack.c.b16 %v374, %v372
        %v495 = vpack.c.b16 %v377, %v375
        %v496 = vpack.c.b16 %v378, %v376
        %v497 = vpack.c.b16 %v381, %v379
        %v498 = vpack.c.b16 %v382, %v380
        %v499 = vpack.c.b16 %v385, %v383
        %v500 = vpack.c.b16 %v386, %v384
        %v501 = vpack.c.b16 %v389, %v387
        %v502 = vpack.c.b16 %v390, %v388
        %v503 = vpack.c.b16 %v393, %v391
        %v504 = vpack.c.b16 %v394, %v392
        %v505 = vpack.c.b16 %v397, %v395
        %v506 = vpack.c.b16 %v398, %v396
        %v507 = vpack.c.b16 %v401, %v399
        %v508 = vpack.c.b16 %v402, %v400
        %v509 = vpack.c.b16 %v405, %v403
        %v510 = vpack.c.b16 %v406, %v404
        %v511 = vpack.c.b16 %v409, %v407
        %v512 = vpack.c.b16 %v410, %v408
        %v513 = vpack.c.b16 %v413, %v411
        %v514 = vpack.c.b16 %v414, %v412
        %v515 = vpack.c.b16 %v417, %v415
        %v516 = vpack.c.b16 %v418, %v416
        %v517 = vpack.c.b16 %v421, %v419
        %v518 = vpack.c.b16 %v422, %v420
        %v519 = vpack.c.b16 %v425, %v423
        %v520 = vpack.c.b16 %v426, %v424
        %v521 = vpack.c.b16 %v429, %v427
        %v522 = vpack.c.b16 %v430, %v428
        %v523 = vpack.c.b16 %v433, %v431
        %v524 = vpack.c.b16 %v434, %v432
        %v525 = vpack.c.b16 %v437, %v435
        %v526 = vpack.c.b16 %v438, %v436
        %v527 = vpack.c.b16 %v441, %v439
        %v528 = vpack.c.b16 %v442, %v440
        %v529 = vpack.c.b16 %v445, %v443
        %v530 = vpack.c.b16 %v446, %v444
        %v531 = vpack.c.b16 %v449, %v447
        %v532 = vpack.c.b16 %v450, %v448
        %v533 = vpack.c.b16 %v453, %v451
        %v534 = vpack.c.b16 %v454, %v452
        %v535 = vpack.c.b16 %v457, %v455
        %v536 = vpack.c.b16 %v458, %v456
        %v537 = vpack.c.b16 %v461, %v459
        %v538 = vpack.c.b16 %v462, %v460
        %v539 = vpack.c.b16 %v465, %v463
        %v540 = vpack.c.b16 %v466, %v464
        %v541 = vpack.c.b16 %v469, %v467
        %v542 = vpack.c.b16 %v470, %v468
        %v543 = vpack.c.b16 %v473, %v471
        %v544 = vpack.c.b16 %v474, %v472
        %v545 = vpack.c.b16 %v477, %v475
        %v546 = vpack.c.b16 %v478, %v476
        %v547 = vpack.c.b16 %v481, %v479
        %v548 = vpack.c.b16 %v482, %v480
        %v549 = vpack.c.b16 %v485, %v483
        %v550 = vpack.c.b16 %v486, %v484
        %615 = vmatprep.subr.bf16.mxu0 %v488
        %616 = vmatpush1.bf16.msra.mxu0 %v487
        %617 = vmatprep.subr.bf16.mxu0 %v490
        %618 = vmatpush1.bf16.msra.mxu0 %v489
        %619 = vmatprep.subr.bf16.mxu0 %v492
        %620 = vmatpush1.bf16.msra.mxu0 %v491
        %621 = vmatprep.subr.bf16.mxu0 %v494
        %622 = vmatpush1.bf16.msra.mxu0 %v493
        %623 = vmatprep.subr.bf16.mxu0 %v496
        %624 = vmatpush1.bf16.msra.mxu0 %v495
        %625 = vmatprep.subr.bf16.mxu0 %v498
        %626 = vmatpush1.bf16.msra.mxu0 %v497
        %627 = vmatprep.subr.bf16.mxu0 %v500
        %628 = vmatpush1.bf16.msra.mxu0 %v499
        %629 = vmatprep.subr.bf16.mxu0 %v502
        %630 = vmatpush1.bf16.msra.mxu0 %v501
        %631 = vmatprep.subr.bf16.mxu0 %v504
        %632 = vmatpush1.bf16.msra.mxu0 %v503
        %633 = vmatprep.subr.bf16.mxu0 %v506
        %634 = vmatpush1.bf16.msra.mxu0 %v505
        %635 = vmatprep.subr.bf16.mxu0 %v508
        %636 = vmatpush1.bf16.msra.mxu0 %v507
        %637 = vmatprep.subr.bf16.mxu0 %v510
        %638 = vmatpush1.bf16.msra.mxu0 %v509
        %639 = vmatprep.subr.bf16.mxu0 %v512
        %640 = vmatpush1.bf16.msra.mxu0 %v511
        %641 = vmatprep.subr.bf16.mxu0 %v514
        %642 = vmatpush1.bf16.msra.mxu0 %v513
        %643 = vmatprep.subr.bf16.mxu0 %v516
        %644 = vmatpush1.bf16.msra.mxu0 %v515
        %645 = vmatprep.subr.bf16.mxu0 %v518
        %646 = vmatpush1.bf16.msra.mxu0 %v517
        %647 = vmatprep.mubr.bf16.mxu0 %v288
        %648 = vmatmul.mubr.bf16.gmra.mrb[0].mxu0 %v281
        %v649 = vpop.f32.mrb[0].mxu0
        %v650 = vadd.f32 0.0, %v649
        %v651 = vpop.f32.mrb[0].mxu0
        %v652 = vadd.f32 0.0, %v651
        %v653 = vpop.f32.mrb[0].mxu0
        %v654 = vpop.f32.mrb[0].mxu0
        %655 = vdwg.mxu0
        %656 = vmatprep.subr.bf16.mxu0 %v520
        %657 = vmatpush1.bf16.msra.mxu0 %v519
        %658 = vmatprep.subr.bf16.mxu0 %v522
        %659 = vmatpush1.bf16.msra.mxu0 %v521
        %660 = vmatprep.subr.bf16.mxu0 %v524
        %661 = vmatpush1.bf16.msra.mxu0 %v523
        %662 = vmatprep.subr.bf16.mxu0 %v526
        %663 = vmatpush1.bf16.msra.mxu0 %v525
        %664 = vmatprep.subr.bf16.mxu0 %v528
        %665 = vmatpush1.bf16.msra.mxu0 %v527
        %666 = vmatprep.subr.bf16.mxu0 %v530
        %667 = vmatpush1.bf16.msra.mxu0 %v529
        %668 = vmatprep.subr.bf16.mxu0 %v532
        %669 = vmatpush1.bf16.msra.mxu0 %v531
        %670 = vmatprep.subr.bf16.mxu0 %v534
        %671 = vmatpush1.bf16.msra.mxu0 %v533
        %672 = vmatprep.subr.bf16.mxu0 %v536
        %673 = vmatpush1.bf16.msra.mxu0 %v535
        %674 = vmatprep.subr.bf16.mxu0 %v538
        %675 = vmatpush1.bf16.msra.mxu0 %v537
        %676 = vmatprep.subr.bf16.mxu0 %v540
        %677 = vmatpush1.bf16.msra.mxu0 %v539
        %678 = vmatprep.subr.bf16.mxu0 %v542
        %679 = vmatpush1.bf16.msra.mxu0 %v541
        %680 = vmatprep.subr.bf16.mxu0 %v544
        %681 = vmatpush1.bf16.msra.mxu0 %v543
        %682 = vmatprep.subr.bf16.mxu0 %v546
        %683 = vmatpush1.bf16.msra.mxu0 %v545
        %684 = vmatprep.subr.bf16.mxu0 %v548
        %685 = vmatpush1.bf16.msra.mxu0 %v547
        %686 = vmatprep.subr.bf16.mxu0 %v550
        %687 = vmatpush1.bf16.msra.mxu0 %v549
        %688 = vmatprep.mubr.bf16.mxu0 %v290
        %689 = vmatmul.mubr.bf16.gmra.mrb[0].mxu0 %v289
        %v690 = vpop.f32.mrb[0].mxu0
        %v691 = vadd.f32 %v650, %v690
        %v692 = vpop.f32.mrb[0].mxu0
        %v693 = vadd.f32 %v652, %v692
        %v694 = vpop.f32.mrb[0].mxu0
        %v695 = vpop.f32.mrb[0].mxu0
        %696 = vdwg.mxu0
        %v699 = vcombine.low %v691, %v693
        %v701 = vunpack.c.l.s4 1983009808
        %v702 = vunpack.c.0.s8 %v701
        %v703 = vlaneseq
        %v704 = vshrl.u32 %v703, 7
        %v705 = vsub.s32 %v702, %v704
        %v706 = vrot.slane %v699, %v705
        %v708 = vadd.f32 %v200, %v706
        %vm709 = vcmask 1041408
        %vm710 = vcmask 519170
        %vm711 = vmor %vm710, %vm709
        %712 = vst.msk [vmem:[%s175] sm:$0xf] %vm711, %v708
        %s713 = sand.u32 %s92, 1
        %s714 = scalar_lea.sflag [#allocation3], %s713
        %s715 = sand.u32 %s92, 1
        %s716 = smul.addr %s715, 4
        %s717 = scalar_lea.vmem [#allocation2], %s716
        // Predicated region
        $region33: #{tpu_custom_call.1} parent=27 // pred_check
          %p718 = pneg %p102
        $region34: #{tpu_custom_call.1} parent=27 // pred_check_branch
          %720 = sbr.rel (%p718) target = $region36
        $region35: #{tpu_custom_call.1} parent=27 // pred_region
          %s722 = ssub.s32 64, 64
          %723 = vsyncadd %s714, %s722
          %s724 = smul.addr %s20, 2
          %s725 = smul.addr %s724, 32
          %s726 = scalar_lea.hbm %s2, %s725
          %s728 = sshll.u32 %s717, 4
          %s729 = int_to_ptr.vmem [resolvable:$true] %s728
          %731 = dma.vmem_to_hbm [thread:$0]  %s729, 64, %s726, %s714
        $region36: #{tpu_custom_call.1} parent=27 // pred_fallthru
          _
      $region28: #{tpu_custom_call.1} parent=5 // pred_fallthru
        _
      %p732 = scmp.le.s32.totalorder 2, %s11
      // Predicated region
      $region37: #{tpu_custom_call.1} parent=5 // pred_check
        %p733 = pneg %p732
      $region38: #{tpu_custom_call.1} parent=5 // pred_check_branch
        %735 = sbr.rel (%p733) target = $region40
      $region39: #{tpu_custom_call.1} parent=5 // pred_region
        %s736 = ssub.s32 %s11, 2
        // Predicated region
        $region41: #{tpu_custom_call.1} parent=39 // pred_check
          %p737 = pneg %p108
        $region42: #{tpu_custom_call.1} parent=39 // pred_check_branch
          %739 = sbr.rel (%p737) target = $region44
        $region43: #{tpu_custom_call.1} parent=39 // pred_region
          %s740 = sand.u32 %s93, 1
          %s741 = scalar_lea.sflag [#allocation3], %s740
          %s742 = sand.u32 %s93, 1
          %s743 = smul.addr %s742, 4
          %s744 = scalar_lea.vmem [#allocation2], %s743
          %745 = dma.done %s741, 64
        $region44: #{tpu_custom_call.1} parent=39 // pred_fallthru
          _
      $region40: #{tpu_custom_call.1} parent=5 // pred_fallthru
        _
    $region6: #{tpu_custom_call.1} parent=1 // loop_footer
      %s15 = sadd.s32 1, %s11
    $region7: #{tpu_custom_call.1} parent=1 // loop_footer_branch
      %10 = sbr.rel target = $region3
    $region8: #{tpu_custom_call.1} parent=1 // loop_exit
      _
    %746 = vsyncpa [#allocation3], 1
    %s747 = scalar_lea.sflag [#allocation3], 1
    %748 = vsyncpa %s747, 1

</llo_original>
